<compile_context>
chip_gen: v5e
topology: v5e:2x2
jax: 0.10.0
libtpu: 0.0.40
codegen_flags: <defaults>
</compile_context>

<pallas_src>
import functools
import math

import jax
import jax.numpy as jnp
from jax import lax
from jax.experimental import pallas as pl
from jax.experimental.pallas import tpu as pltpu


def _qkv_proj_kernel(x_ref, wq_ref, wk_ref, wv_ref, q_ref, k_ref, v_ref):
    x = x_ref[0]  # (tp, C) in MXU dtype
    q_ref[0] = jnp.dot(x, wq_ref[...],
                       preferred_element_type=jnp.float32).astype(q_ref.dtype)
    k_ref[0] = jnp.dot(x, wk_ref[...],
                       preferred_element_type=jnp.float32).astype(k_ref.dtype)
    v_ref[0] = jnp.dot(x, wv_ref[...],
                       preferred_element_type=jnp.float32).astype(v_ref.dtype)


def _flash_attn_kernel(q_ref, k_ref, v_ref, o_ref, m_sc, l_sc, acc_sc,
                       *, seq_len, needs_mask):
    ki = pl.program_id(2)

    @pl.when(ki == 0)
    def _init():
        m_sc[...] = jnp.full_like(m_sc, -jnp.inf)
        l_sc[...] = jnp.zeros_like(l_sc)
        acc_sc[...] = jnp.zeros_like(acc_sc)

    q = q_ref[0]  # (tq, H)
    k = k_ref[0]  # (tk, H)
    v = v_ref[0]  # (tk, H)

    # Scores: contract the head dim of both operands (no explicit transpose).
    s = lax.dot_general(q, k, dimension_numbers=(((1,), (1,)), ((), ())),
                        preferred_element_type=jnp.float32)  # (tq, tk)

    if needs_mask:
        tk = k.shape[0]
        col = lax.broadcasted_iota(jnp.int32, s.shape, 1)
        s = jnp.where(ki * tk + col < seq_len, s, -1e30)

    # Online (flash) softmax update; statistics and accumulator stay f32.
    m_prev = m_sc[...]
    m_new = jnp.maximum(m_prev, jnp.max(s, axis=-1, keepdims=True))
    alpha = jnp.exp(m_prev - m_new)
    p = jnp.exp(s - m_new)
    l_sc[...] = alpha * l_sc[...] + jnp.sum(p, axis=-1, keepdims=True)
    acc_sc[...] = alpha * acc_sc[...] + jnp.dot(
        p.astype(v.dtype), v, preferred_element_type=jnp.float32)
    m_sc[...] = m_new

    @pl.when(ki == pl.num_programs(2) - 1)
    def _finalize():
        # Exact normalization (once per query tile => the divide is free).
        o_ref[0] = (acc_sc[...] / l_sc[...]).astype(o_ref.dtype)


def _round_up(x, m):
    return ((x + m - 1) // m) * m


def _pick_tile(T):
    """Lane/MXU-aligned tile: prefer 256 (v6e/v7x MXU width), else 128; tiny
    sequences use the whole (8-rounded) sequence as a single tile."""
    if T < 128:
        return _round_up(T, 8)
    if _round_up(T, 256) <= _round_up(T, 128):
        return 256
    return 128


def _vmem_limit(nbytes):
    # 2x headroom over our own estimate, never below the 32 MiB default scoped
    # limit, capped well under physical VMEM.
    return int(min(100 * 2**20, max(32 * 2**20, 2 * nbytes + (4 << 20))))


def self_attention(x, wk, wq, wv, *, tq=None, tk=None, mxu_dtype=None):
    """x: (B, T, C); wk/wq/wv: (C, H) pre-transposed nn.Linear weights.
    Returns softmax(q k^T / sqrt(H)) v with shape (B, T, H)."""
    B, T, C = x.shape
    H = wk.shape[-1]
    out_dtype = x.dtype

    if mxu_dtype is None:
        # bf16 MXU operands (f32 accumulation) even for f32 inputs: ~2-4x MXU
        # throughput at negligible accuracy cost for attention.
        mxu_dtype = jnp.bfloat16 if x.dtype == jnp.float32 else x.dtype

    if tq is None:
        tq = _pick_tile(T)
    if tk is None:
        tk = _pick_tile(T)
    tp = tq  # projection tile along the sequence

    # Pad the sequence so every tile divides it; padded keys are masked in-kernel.
    T_pad = _round_up(T, math.lcm(tq, tk))
    needs_mask = T_pad > T

    x_c = x.astype(mxu_dtype)
    if needs_mask:
        x_c = jnp.pad(x_c, ((0, 0), (0, T_pad - T), (0, 0)))

    # Fold the attention scale into Wq (scaled in f32, cast once).
    scale = jnp.float32(H) ** jnp.float32(-0.5)
    wq_c = (wq.astype(jnp.float32) * scale).astype(mxu_dtype)
    wk_c = wk.astype(mxu_dtype)
    wv_c = wv.astype(mxu_dtype)

    m_isz = jnp.dtype(mxu_dtype).itemsize
    o_isz = jnp.dtype(out_dtype).itemsize
    nq, nk, npj = T_pad // tq, T_pad // tk, T_pad // tp

    # ---- 1) Fused Q/K/V projection (runs once per token). -------------------
    proj_cost = pl.CostEstimate(
        flops=int(2 * B * T_pad * C * 3 * H),
        transcendentals=0,
        bytes_accessed=int((B * T_pad * C + 3 * C * H + 3 * B * T_pad * H) * m_isz),
    )
    proj_vmem = 2 * (tp * C + 3 * C * H + 3 * tp * H) * m_isz
    qkv_shape = jax.ShapeDtypeStruct((B, T_pad, H), mxu_dtype)

    q, k, v = pl.pallas_call(
        _qkv_proj_kernel,
        out_shape=(qkv_shape, qkv_shape, qkv_shape),
        grid_spec=pltpu.PrefetchScalarGridSpec(
            num_scalar_prefetch=0,
            grid=(B, npj),
            in_specs=[
                pl.BlockSpec((1, tp, C), lambda b, i: (b, i, 0)),   # x tile
                pl.BlockSpec((C, H), lambda b, i: (0, 0)),          # Wq (pre-scaled)
                pl.BlockSpec((C, H), lambda b, i: (0, 0)),          # Wk
                pl.BlockSpec((C, H), lambda b, i: (0, 0)),          # Wv
            ],
            out_specs=[
                pl.BlockSpec((1, tp, H), lambda b, i: (b, i, 0)),
                pl.BlockSpec((1, tp, H), lambda b, i: (b, i, 0)),
                pl.BlockSpec((1, tp, H), lambda b, i: (b, i, 0)),
            ],
        ),
        compiler_params=pltpu.CompilerParams(
            dimension_semantics=("parallel", "parallel"),
            vmem_limit_bytes=_vmem_limit(proj_vmem),
        ),
        cost_estimate=proj_cost,
    )(x_c, wq_c, wk_c, wv_c)

    # ---- 2) Flash attention over the projected q, k, v. ---------------------
    attn_cost = pl.CostEstimate(
        flops=int(4 * B * T_pad * T_pad * H),
        transcendentals=int(B * T_pad * T_pad),
        bytes_accessed=int((B * T_pad * H                 # q, read once
                            + 2 * B * T_pad * H * nq      # k, v re-read per q tile
                            ) * m_isz
                           + B * T_pad * H * o_isz),      # output write
    )
    attn_vmem = (2 * (tq * H + 2 * tk * H) * m_isz
                 + 2 * tq * H * o_isz
                 + (2 * tq + tq * H) * 4)

    kernel = functools.partial(_flash_attn_kernel, seq_len=T,
                               needs_mask=needs_mask)
    out = pl.pallas_call(
        kernel,
        out_shape=jax.ShapeDtypeStruct((B, T_pad, H), out_dtype),
        grid_spec=pltpu.PrefetchScalarGridSpec(
            num_scalar_prefetch=0,
            grid=(B, nq, nk),
            in_specs=[
                pl.BlockSpec((1, tq, H), lambda b, qi, ki: (b, qi, 0)),  # q
                pl.BlockSpec((1, tk, H), lambda b, qi, ki: (b, ki, 0)),  # k
                pl.BlockSpec((1, tk, H), lambda b, qi, ki: (b, ki, 0)),  # v
            ],
            out_specs=pl.BlockSpec((1, tq, H), lambda b, qi, ki: (b, qi, 0)),
            scratch_shapes=[
                pltpu.VMEM((tq, 1), jnp.float32),   # running max
                pltpu.VMEM((tq, 1), jnp.float32),   # running denominator
                pltpu.VMEM((tq, H), jnp.float32),   # output accumulator
            ],
        ),
        compiler_params=pltpu.CompilerParams(
            dimension_semantics=("parallel", "parallel", "arbitrary"),
            vmem_limit_bytes=_vmem_limit(attn_vmem),
        ),
        cost_estimate=attn_cost,
    )(q, k, v)

    if needs_mask:
        out = out[:, :T, :]
    return out


def _reference(x, wk, wq, wv):
    k = x @ wk
    q = x @ wq
    v = x @ wv
    wei = (q @ jnp.swapaxes(k, -2, -1)) * (wk.shape[-1] ** -0.5)
    wei = jax.nn.softmax(wei, axis=-1)
    return wei @ v


if __name__ == "__main__":
    # Small shapes consistent with the module: B=2, T=8, n_embd=32, head_size=16
    B, T, C, H = 2, 8, 32, 16

    key = jax.random.PRNGKey(0)
    k_x, k_k, k_q, k_v = jax.random.split(key, 4)

    x = jax.random.normal(k_x, (B, T, C), dtype=jnp.float32)
    # Deterministic params (shapes match nn.Linear(C, H, bias=False), pre-transposed)
    wk = jax.random.normal(k_k, (C, H), dtype=jnp.float32) * 0.02
    wq = jax.random.normal(k_q, (C, H), dtype=jnp.float32) * 0.02
    wv = jax.random.normal(k_v, (C, H), dtype=jnp.float32) * 0.02

    out = jax.block_until_ready(self_attention(x, wk, wq, wv))
    ref = _reference(x, wk, wq, wv)
    assert out.shape == (B, T, H)
    assert out.dtype == x.dtype
    # bf16 MXU operands (f32 accumulation) => modest tolerance vs f32 reference.
    assert jnp.allclose(out, ref, atol=1e-2, rtol=1e-2), "mismatch vs reference"

    # Second check: sequence length that needs padding + key masking (T=12 -> tile 16).
    T2 = 12
    x2 = jax.random.normal(jax.random.PRNGKey(1), (1, T2, C), dtype=jnp.float32)
    out2 = jax.block_until_ready(self_attention(x2, wk, wq, wv))
    ref2 = _reference(x2, wk, wq, wv)
    assert out2.shape == (1, T2, H)
    assert jnp.allclose(out2, ref2, atol=1e-2, rtol=1e-2), "mismatch vs reference (padded)"

    print("KERNEL_OK")
</pallas_src>

<mosaic_0001>
module attributes {stable_mosaic.version = 11 : i64} {
  func.func @_qkv_proj_kernel(%arg0: i32, %arg1: i32, %arg2: memref<1x8x32xbf16, #tpu.memory_space<vmem>>, %arg3: memref<32x16xbf16, #tpu.memory_space<vmem>>, %arg4: memref<32x16xbf16, #tpu.memory_space<vmem>>, %arg5: memref<32x16xbf16, #tpu.memory_space<vmem>>, %arg6: memref<1x8x16xbf16, #tpu.memory_space<vmem>>, %arg7: memref<1x8x16xbf16, #tpu.memory_space<vmem>>, %arg8: memref<1x8x16xbf16, #tpu.memory_space<vmem>>) attributes {dimension_semantics = [#tpu.dimension_semantics<parallel>, #tpu.dimension_semantics<parallel>], iteration_bounds = array<i64: 2, 1>, scalar_prefetch = 0 : i64, scratch_operands = 0 : i64, tpu.core_type = #tpu.core_type<tc>, window_params = [{transform_indices = @transform_0, window_bounds = array<i64: 1, 8, 32>}, {pipeline_mode = #tpu.pipeline_mode<synchronous>, transform_indices = @transform_1, window_bounds = array<i64: 32, 16>}, {pipeline_mode = #tpu.pipeline_mode<synchronous>, transform_indices = @transform_2, window_bounds = array<i64: 32, 16>}, {pipeline_mode = #tpu.pipeline_mode<synchronous>, transform_indices = @transform_3, window_bounds = array<i64: 32, 16>}, {transform_indices = @transform_4, window_bounds = array<i64: 1, 8, 16>}, {transform_indices = @transform_5, window_bounds = array<i64: 1, 8, 16>}, {transform_indices = @transform_6, window_bounds = array<i64: 1, 8, 16>}]} {
    %c0 = arith.constant 0 : index
    %c0_0 = arith.constant 0 : index
    %c0_1 = arith.constant 0 : index
    %0 = vector.load %arg2[%c0, %c0_0, %c0_1] : memref<1x8x32xbf16, #tpu.memory_space<vmem>>, vector<1x8x32xbf16>
    %1 = vector.shape_cast %0 : vector<1x8x32xbf16> to vector<8x32xbf16>
    %c0_2 = arith.constant 0 : index
    %c0_3 = arith.constant 0 : index
    %2 = vector.load %arg3[%c0_2, %c0_3] : memref<32x16xbf16, #tpu.memory_space<vmem>>, vector<32x16xbf16>
    %cst = arith.constant dense<0.000000e+00> : vector<8x16xf32>
    %3 = tpu.matmul %1, %2, %cst {dimension_numbers = #tpu.dot_dimension_numbers<[1], [0], [0], [1], [0, 0, 1, 1], [], []>} : vector<8x32xbf16>, vector<32x16xbf16>, vector<8x16xf32> -> vector<8x16xf32>
    %4 = arith.truncf %3 : vector<8x16xf32> to vector<8x16xbf16>
    %c0_4 = arith.constant 0 : index
    %c0_5 = arith.constant 0 : index
    %c0_6 = arith.constant 0 : index
    %5 = vector.load %arg6[%c0_4, %c0_5, %c0_6] : memref<1x8x16xbf16, #tpu.memory_space<vmem>>, vector<1x8x16xbf16>
    %6 = vector.shape_cast %5 : vector<1x8x16xbf16> to vector<8x16xbf16>
    %7 = vector.shape_cast %4 : vector<8x16xbf16> to vector<1x8x16xbf16>
    tpu.vector_store %arg6[%c0_4, %c0_5, %c0_6], %7 {strides = array<i32>} : memref<1x8x16xbf16, #tpu.memory_space<vmem>>, vector<1x8x16xbf16>,
    %c0_7 = arith.constant 0 : index
    %c0_8 = arith.constant 0 : index
    %8 = vector.load %arg4[%c0_7, %c0_8] : memref<32x16xbf16, #tpu.memory_space<vmem>>, vector<32x16xbf16>
    %cst_9 = arith.constant dense<0.000000e+00> : vector<8x16xf32>
    %9 = tpu.matmul %1, %8, %cst_9 {dimension_numbers = #tpu.dot_dimension_numbers<[1], [0], [0], [1], [0, 0, 1, 1], [], []>} : vector<8x32xbf16>, vector<32x16xbf16>, vector<8x16xf32> -> vector<8x16xf32>
    %10 = arith.truncf %9 : vector<8x16xf32> to vector<8x16xbf16>
    %c0_10 = arith.constant 0 : index
    %c0_11 = arith.constant 0 : index
    %c0_12 = arith.constant 0 : index
    %11 = vector.load %arg7[%c0_10, %c0_11, %c0_12] : memref<1x8x16xbf16, #tpu.memory_space<vmem>>, vector<1x8x16xbf16>
    %12 = vector.shape_cast %11 : vector<1x8x16xbf16> to vector<8x16xbf16>
    %13 = vector.shape_cast %10 : vector<8x16xbf16> to vector<1x8x16xbf16>
    tpu.vector_store %arg7[%c0_10, %c0_11, %c0_12], %13 {strides = array<i32>} : memref<1x8x16xbf16, #tpu.memory_space<vmem>>, vector<1x8x16xbf16>,
    %c0_13 = arith.constant 0 : index
    %c0_14 = arith.constant 0 : index
    %14 = vector.load %arg5[%c0_13, %c0_14] : memref<32x16xbf16, #tpu.memory_space<vmem>>, vector<32x16xbf16>
    %cst_15 = arith.constant dense<0.000000e+00> : vector<8x16xf32>
    %15 = tpu.matmul %1, %14, %cst_15 {dimension_numbers = #tpu.dot_dimension_numbers<[1], [0], [0], [1], [0, 0, 1, 1], [], []>} : vector<8x32xbf16>, vector<32x16xbf16>, vector<8x16xf32> -> vector<8x16xf32>
    %16 = arith.truncf %15 : vector<8x16xf32> to vector<8x16xbf16>
    %c0_16 = arith.constant 0 : index
    %c0_17 = arith.constant 0 : index
    %c0_18 = arith.constant 0 : index
    %17 = vector.load %arg8[%c0_16, %c0_17, %c0_18] : memref<1x8x16xbf16, #tpu.memory_space<vmem>>, vector<1x8x16xbf16>
    %18 = vector.shape_cast %17 : vector<1x8x16xbf16> to vector<8x16xbf16>
    %19 = vector.shape_cast %16 : vector<8x16xbf16> to vector<1x8x16xbf16>
    tpu.vector_store %arg8[%c0_16, %c0_17, %c0_18], %19 {strides = array<i32>} : memref<1x8x16xbf16, #tpu.memory_space<vmem>>, vector<1x8x16xbf16>,
    return
  }
  func.func @transform_0(%arg0: i32, %arg1: i32) -> (i32, i32, i32) {
    %c0_i32 = arith.constant 0 : i32
    %c0_i32_0 = arith.constant 0 : i32
    return %arg0, %arg1, %c0_i32 : i32, i32, i32
  }
  func.func @transform_1(%arg0: i32, %arg1: i32) -> (i32, i32) {
    %c0_i32 = arith.constant 0 : i32
    %c0_i32_0 = arith.constant 0 : i32
    %c0_i32_1 = arith.constant 0 : i32
    return %c0_i32, %c0_i32_0 : i32, i32
  }
  func.func @transform_2(%arg0: i32, %arg1: i32) -> (i32, i32) {
    %c0_i32 = arith.constant 0 : i32
    %c0_i32_0 = arith.constant 0 : i32
    %c0_i32_1 = arith.constant 0 : i32
    return %c0_i32, %c0_i32_0 : i32, i32
  }
  func.func @transform_3(%arg0: i32, %arg1: i32) -> (i32, i32) {
    %c0_i32 = arith.constant 0 : i32
    %c0_i32_0 = arith.constant 0 : i32
    %c0_i32_1 = arith.constant 0 : i32
    return %c0_i32, %c0_i32_0 : i32, i32
  }
  func.func @transform_4(%arg0: i32, %arg1: i32) -> (i32, i32, i32) {
    %c0_i32 = arith.constant 0 : i32
    %c0_i32_0 = arith.constant 0 : i32
    return %arg0, %arg1, %c0_i32 : i32, i32, i32
  }
  func.func @transform_5(%arg0: i32, %arg1: i32) -> (i32, i32, i32) {
    %c0_i32 = arith.constant 0 : i32
    %c0_i32_0 = arith.constant 0 : i32
    return %arg0, %arg1, %c0_i32 : i32, i32, i32
  }
  func.func @transform_6(%arg0: i32, %arg1: i32) -> (i32, i32, i32) {
    %c0_i32 = arith.constant 0 : i32
    %c0_i32_0 = arith.constant 0 : i32
    return %arg0, %arg1, %c0_i32 : i32, i32, i32
  }
}

</mosaic_0001>

<llo_original>
// kernel: tpu_custom_call.1
$region0: #{tpu_custom_call.1}
  #allocation0 [shape = 'u32[]', space=smem, size = 0x4, offset = 0x4, fixed_abs, tag = 'smem constant byte address 0x4 - core index']
  #allocation1 [shape = 'u32[72,128]{1,0:T(1,128)}', space=vmem, size = 0x9000, scoped, tag = 'internal scratch']
  %s0 = inlined_call_operand.vmem [shape: bf16[2,8,32], index: 0, kind: input, shape index: {}]
  %s1 = inlined_call_operand.vmem [shape: bf16[32,16], index: 1, kind: input, shape index: {}]
  %s2 = inlined_call_operand.vmem [shape: bf16[32,16], index: 2, kind: input, shape index: {}]
  %s3 = inlined_call_operand.vmem [shape: bf16[32,16], index: 3, kind: input, shape index: {}]
  %s4 = inlined_call_operand.hbm [shape: bf16[2,8,16], index: 4, kind: output, shape index: {0}]
  %s5 = inlined_call_operand.hbm [shape: bf16[2,8,16], index: 5, kind: output, shape index: {1}]
  %s6 = inlined_call_operand.hbm [shape: bf16[2,8,16], index: 6, kind: output, shape index: {2}]
  %7 = xla_tuple %s4, %s5, %s6
  %s8 = sld [smem:[#allocation0]]
  $region65: #{tpu_custom_call.1} parent=0
    _
  %s10 = ssub.s32 1, %s8
  %s11 = scalar_select 0, %s10, %s8
  $region1: #{tpu_custom_call.1} parent=0
    #allocation2 [shape = 'u8[4096]{0}', space=vmem, size = 0x1000, scoped, tag = 'output window, operand 0']
    #allocation3 [shape = 's32[2]{0}', space=sflag, size = 0x8, scoped, tag = 'scoped memory for tpu_custom_call.1']
    #allocation4 [shape = 'u8[4096]{0}', space=vmem, size = 0x1000, scoped, tag = 'output window, operand 1']
    #allocation5 [shape = 's32[2]{0}', space=sflag, size = 0x8, scoped, tag = 'scoped memory for tpu_custom_call.1']
    #allocation6 [shape = 'u8[4096]{0}', space=vmem, size = 0x1000, scoped, tag = 'output window, operand 2']
    %12 = vsyncpa [#allocation3], 0
    %s13 = scalar_lea.sflag [#allocation3], 1
    %14 = vsyncpa %s13, 0
    %15 = vsyncpa [#allocation5], 0
    %s16 = scalar_lea.sflag [#allocation5], 1
    %17 = vsyncpa %s16, 0
    loop: start=0, step=1, limit=4
    $region2: #{tpu_custom_call.1} parent=1 // loop_pre_header
      _
    $region3: #{tpu_custom_call.1} parent=1 // loop_header
      %s19 = sphi 0, %s23
      %p20 = scmp.ge.s32.totalorder %s19, 4
      %s26 = sphi 0, %s38
      %s27 = sphi 0, %s34
      %s28 = sphi 0, %s26
      %s29 = sphi 0, %s27
      %s30 = sphi 0, %s28
      %s31 = sphi 0, %s29
      %s43 = sphi 0, %s45
      %s46 = sphi 0, %s43
      %s47 = sphi 0, %s46
      %s63 = sphi 0, %s47
      %s67 = sphi 0, %s67
      %s69 = sphi 0, %s67
      %s70 = sphi 0, %s69
      %s84 = sphi 0, %s70
      %s88 = sphi 0, %s88
      %s90 = sphi 0, %s88
      %s91 = sphi 0, %s90
      %s105 = sphi 0, %s91
      %s109 = sphi 0, %s109
      %s111 = sphi 0, %s109
      %s112 = sphi 0, %s111
      %s126 = sphi 0, %s112
      %s134 = sphi 0, %s136
      %s137 = sphi 0, %s134
      %s138 = sphi 0, %s137
      %s154 = sphi 0, %s138
      %s162 = sphi 0, %s164
      %s165 = sphi 0, %s162
      %s166 = sphi 0, %s165
      %s182 = sphi 0, %s166
      %s190 = sphi 0, %s192
      %s193 = sphi 0, %s190
      %s194 = sphi 0, %s193
      %s210 = sphi 0, %s194
    $region4: #{tpu_custom_call.1} parent=1 // loop_header_branch
      %22 = sbr.rel (%p20) target = $region8
    $region5: #{tpu_custom_call.1} parent=1 // loop_body
      %s24 = ssub.s32 %s19, 1
      %s25 = ssub.s32 %s19, 2
      %s32 = sadd.s32 1, %s27
      %p33 = scmp.ge.s32.totalorder %s32, 1
      %s34 = scalar_select %p33, 0, %s32
      %s35 = sadd.s32 1, %s26
      %s36 = scalar_select %p33, %s35, %s26
      %p37 = scmp.ge.s32.totalorder %s36, 2
      %s38 = scalar_select %p37, 0, %s36
      %s39 = ssub.s32 %s26, %s38
      %s40 = ssub.s32 %s27, %s34
      %s41 = sor.u32 %s39, %s40
      %p42 = scmp.eq.s32.totalorder %s41, 0
      %s44 = sadd.s32 %s43, 1
      %s45 = scalar_select %p42, %s43, %s44
      %p48 = pneg %p42
      %p49 = scmp.eq.s32.totalorder %s19, 1
      %p50 = por %p48, %p49
      %p51 = scmp.ne.s32.totalorder %s43, %s46
      %p52 = scmp.eq.s32.totalorder %s19, 0
      %p53 = por %p51, %p52
      %p54 = scmp.ne.s32.totalorder %s43, %s46
      %p55 = scmp.eq.s32.totalorder %s24, 1
      %p56 = por %p54, %p55
      %p57 = scmp.ne.s32.totalorder %s46, %s47
      %p58 = scmp.eq.s32.totalorder %s24, 0
      %p59 = por %p57, %p58
      %p60 = scmp.ne.s32.totalorder %s46, %s47
      %p61 = scmp.eq.s32.totalorder %s25, 1
      %p62 = por %p60, %p61
      %p64 = scmp.ne.s32.totalorder %s47, %s63
      %p65 = scmp.eq.s32.totalorder %s25, 0
      %p66 = por %p64, %p65
      %s68 = sadd.s32 %s67, 1
      %p71 = scmp.eq.s32.totalorder %s19, 1
      %p72 = scmp.ne.s32.totalorder %s67, %s69
      %p73 = scmp.eq.s32.totalorder %s19, 0
      %p74 = por %p72, %p73
      %p75 = scmp.ne.s32.totalorder %s67, %s69
      %p76 = scmp.eq.s32.totalorder %s24, 1
      %p77 = por %p75, %p76
      %p78 = scmp.ne.s32.totalorder %s69, %s70
      %p79 = scmp.eq.s32.totalorder %s24, 0
      %p80 = por %p78, %p79
      %p81 = scmp.ne.s32.totalorder %s69, %s70
      %p82 = scmp.eq.s32.totalorder %s25, 1
      %p83 = por %p81, %p82
      %p85 = scmp.ne.s32.totalorder %s70, %s84
      %p86 = scmp.eq.s32.totalorder %s25, 0
      %p87 = por %p85, %p86
      %s89 = sadd.s32 %s88, 1
      %p92 = scmp.eq.s32.totalorder %s19, 1
      %p93 = scmp.ne.s32.totalorder %s88, %s90
      %p94 = scmp.eq.s32.totalorder %s19, 0
      %p95 = por %p93, %p94
      %p96 = scmp.ne.s32.totalorder %s88, %s90
      %p97 = scmp.eq.s32.totalorder %s24, 1
      %p98 = por %p96, %p97
      %p99 = scmp.ne.s32.totalorder %s90, %s91
      %p100 = scmp.eq.s32.totalorder %s24, 0
      %p101 = por %p99, %p100
      %p102 = scmp.ne.s32.totalorder %s90, %s91
      %p103 = scmp.eq.s32.totalorder %s25, 1
      %p104 = por %p102, %p103
      %p106 = scmp.ne.s32.totalorder %s91, %s105
      %p107 = scmp.eq.s32.totalorder %s25, 0
      %p108 = por %p106, %p107
      %s110 = sadd.s32 %s109, 1
      %p113 = scmp.eq.s32.totalorder %s19, 1
      %p114 = scmp.ne.s32.totalorder %s109, %s111
      %p115 = scmp.eq.s32.totalorder %s19, 0
      %p116 = por %p114, %p115
      %p117 = scmp.ne.s32.totalorder %s109, %s111
      %p118 = scmp.eq.s32.totalorder %s24, 1
      %p119 = por %p117, %p118
      %p120 = scmp.ne.s32.totalorder %s111, %s112
      %p121 = scmp.eq.s32.totalorder %s24, 0
      %p122 = por %p120, %p121
      %p123 = scmp.ne.s32.totalorder %s111, %s112
      %p124 = scmp.eq.s32.totalorder %s25, 1
      %p125 = por %p123, %p124
      %p127 = scmp.ne.s32.totalorder %s112, %s126
      %p128 = scmp.eq.s32.totalorder %s25, 0
      %p129 = por %p127, %p128
      %s130 = ssub.s32 %s26, %s38
      %s131 = ssub.s32 %s27, %s34
      %s132 = sor.u32 %s130, %s131
      %p133 = scmp.eq.s32.totalorder %s132, 0
      %s135 = sadd.s32 %s134, 1
      %s136 = scalar_select %p133, %s134, %s135
      %p139 = pneg %p133
      %p140 = scmp.eq.s32.totalorder %s19, 1
      %p141 = por %p139, %p140
      %p142 = scmp.ne.s32.totalorder %s134, %s137
      %p143 = scmp.eq.s32.totalorder %s19, 0
      %p144 = por %p142, %p143
      %p145 = scmp.ne.s32.totalorder %s134, %s137
      %p146 = scmp.eq.s32.totalorder %s24, 1
      %p147 = por %p145, %p146
      %p148 = scmp.ne.s32.totalorder %s137, %s138
      %p149 = scmp.eq.s32.totalorder %s24, 0
      %p150 = por %p148, %p149
      %p151 = scmp.ne.s32.totalorder %s137, %s138
      %p152 = scmp.eq.s32.totalorder %s25, 1
      %p153 = por %p151, %p152
      %p155 = scmp.ne.s32.totalorder %s138, %s154
      %p156 = scmp.eq.s32.totalorder %s25, 0
      %p157 = por %p155, %p156
      %s158 = ssub.s32 %s26, %s38
      %s159 = ssub.s32 %s27, %s34
      %s160 = sor.u32 %s158, %s159
      %p161 = scmp.eq.s32.totalorder %s160, 0
      %s163 = sadd.s32 %s162, 1
      %s164 = scalar_select %p161, %s162, %s163
      %p167 = pneg %p161
      %p168 = scmp.eq.s32.totalorder %s19, 1
      %p169 = por %p167, %p168
      %p170 = scmp.ne.s32.totalorder %s162, %s165
      %p171 = scmp.eq.s32.totalorder %s19, 0
      %p172 = por %p170, %p171
      %p173 = scmp.ne.s32.totalorder %s162, %s165
      %p174 = scmp.eq.s32.totalorder %s24, 1
      %p175 = por %p173, %p174
      %p176 = scmp.ne.s32.totalorder %s165, %s166
      %p177 = scmp.eq.s32.totalorder %s24, 0
      %p178 = por %p176, %p177
      %p179 = scmp.ne.s32.totalorder %s165, %s166
      %p180 = scmp.eq.s32.totalorder %s25, 1
      %p181 = por %p179, %p180
      %p183 = scmp.ne.s32.totalorder %s166, %s182
      %p184 = scmp.eq.s32.totalorder %s25, 0
      %p185 = por %p183, %p184
      %s186 = ssub.s32 %s26, %s38
      %s187 = ssub.s32 %s27, %s34
      %s188 = sor.u32 %s186, %s187
      %p189 = scmp.eq.s32.totalorder %s188, 0
      %s191 = sadd.s32 %s190, 1
      %s192 = scalar_select %p189, %s190, %s191
      %p195 = pneg %p189
      %p196 = scmp.eq.s32.totalorder %s19, 1
      %p197 = por %p195, %p196
      %p198 = scmp.ne.s32.totalorder %s190, %s193
      %p199 = scmp.eq.s32.totalorder %s19, 0
      %p200 = por %p198, %p199
      %p201 = scmp.ne.s32.totalorder %s190, %s193
      %p202 = scmp.eq.s32.totalorder %s24, 1
      %p203 = por %p201, %p202
      %p204 = scmp.ne.s32.totalorder %s193, %s194
      %p205 = scmp.eq.s32.totalorder %s24, 0
      %p206 = por %p204, %p205
      %p207 = scmp.ne.s32.totalorder %s193, %s194
      %p208 = scmp.eq.s32.totalorder %s25, 1
      %p209 = por %p207, %p208
      %p211 = scmp.ne.s32.totalorder %s194, %s210
      %p212 = scmp.eq.s32.totalorder %s25, 0
      %p213 = por %p211, %p212
      %p214 = scmp.le.s32.totalorder 1, %s19
      %p215 = scmp.lt.s32.totalorder %s19, 3
      %p216 = pnand %p214, %p215
      %p217 = pneg %p216
      // Predicated region
      $region9: #{tpu_custom_call.1} parent=5 // pred_check
        _
      $region10: #{tpu_custom_call.1} parent=5 // pred_check_branch
        %219 = sbr.rel (%p216) target = $region12
      $region11: #{tpu_custom_call.1} parent=5 // pred_region
        %s220 = ssub.s32 %s19, 1
        // Predicated region
        $region13: #{tpu_custom_call.1} parent=11 // pred_check
          %p221 = pneg %p80
        $region14: #{tpu_custom_call.1} parent=11 // pred_check_branch
          %223 = sbr.rel (%p221) target = $region16
        $region15: #{tpu_custom_call.1} parent=11 // pred_region
          _
        $region16: #{tpu_custom_call.1} parent=11 // pred_fallthru
          _
        // Predicated region
        $region17: #{tpu_custom_call.1} parent=11 // pred_check
          %p224 = pneg %p101
        $region18: #{tpu_custom_call.1} parent=11 // pred_check_branch
          %226 = sbr.rel (%p224) target = $region20
        $region19: #{tpu_custom_call.1} parent=11 // pred_region
          _
        $region20: #{tpu_custom_call.1} parent=11 // pred_fallthru
          _
        // Predicated region
        $region21: #{tpu_custom_call.1} parent=11 // pred_check
          %p227 = pneg %p122
        $region22: #{tpu_custom_call.1} parent=11 // pred_check_branch
          %229 = sbr.rel (%p227) target = $region24
        $region23: #{tpu_custom_call.1} parent=11 // pred_region
          _
        $region24: #{tpu_custom_call.1} parent=11 // pred_fallthru
          _
      $region12: #{tpu_custom_call.1} parent=5 // pred_fallthru
        _
      %p230 = scmp.lt.s32.totalorder %s19, 2
      // Predicated region
      $region25: #{tpu_custom_call.1} parent=5 // pred_check
        %p231 = pneg %p230
      $region26: #{tpu_custom_call.1} parent=5 // pred_check_branch
        %233 = sbr.rel (%p231) target = $region28
      $region27: #{tpu_custom_call.1} parent=5 // pred_region
        // Predicated region
        $region29: #{tpu_custom_call.1} parent=27 // pred_check
          %p234 = pneg %p53
        $region30: #{tpu_custom_call.1} parent=27 // pred_check_branch
          %236 = sbr.rel (%p234) target = $region32
        $region31: #{tpu_custom_call.1} parent=27 // pred_region
          %p237 = scmp.lt.s32.totalorder %s26, 1
          %s238 = scalar_select %p237, %s26, 1
          %p239 = scmp.lt.s32.totalorder %s27, 0
          %s240 = scalar_select %p239, %s27, 0
          %s241 = sadd.s32 %s240, %s238
          %s242 = smul.addr %s241, 4
          %s243 = scalar_lea.vmem %s0, %s242
        $region32: #{tpu_custom_call.1} parent=27 // pred_fallthru
          _
      $region28: #{tpu_custom_call.1} parent=5 // pred_fallthru
        _
      %p244 = scmp.le.s32.totalorder 1, %s19
      %p245 = scmp.lt.s32.totalorder %s19, 3
      %p246 = pnand %p244, %p245
      %p247 = pneg %p246
      // Predicated region
      $region33: #{tpu_custom_call.1} parent=5 // pred_check
        _
      $region34: #{tpu_custom_call.1} parent=5 // pred_check_branch
        %249 = sbr.rel (%p246) target = $region36
      $region35: #{tpu_custom_call.1} parent=5 // pred_region
        %s250 = ssub.s32 %s19, 1
        %p251 = scmp.lt.s32.totalorder %s28, 1
        %s252 = scalar_select %p251, %s28, 1
        %p253 = scmp.lt.s32.totalorder %s29, 0
        %s254 = scalar_select %p253, %s29, 0
        %s255 = sadd.s32 %s254, %s252
        %s256 = smul.addr %s255, 4
        %s257 = scalar_lea.vmem %s0, %s256
        %p258 = pneg %p59
        %p259 = pneg %p56
        %p260 = pneg %p80
        %p261 = pneg %p77
        %p262 = pneg %p101
        %p263 = pneg %p98
        %p264 = pneg %p122
        %p265 = pneg %p119
        %p266 = pneg %p150
        %p267 = pneg %p147
        %s268 = sand.u32 %s137, 1
        %s269 = scalar_lea.sflag [#allocation3], %s268
        %s270 = sand.u32 %s137, 1
        %s271 = smul.addr %s270, 4
        %s272 = scalar_lea.vmem [#allocation2], %s271
        %p273 = pneg %p178
        %p274 = pneg %p175
        %s275 = sand.u32 %s24, 1
        %s276 = scalar_lea.sflag [#allocation5], %s275
        %s277 = sand.u32 %s165, 1
        %s278 = smul.addr %s277, 4
        %s279 = scalar_lea.vmem [#allocation4], %s278
        %p280 = pneg %p206
        %p281 = pneg %p203
        %s282 = sand.u32 %s24, 1
        %s283 = scalar_lea.sflag [#allocation5], %s282
        %s284 = sand.u32 %s193, 1
        %s285 = smul.addr %s284, 4
        %s286 = scalar_lea.vmem [#allocation6], %s285
        %p287 = scmp.lt.s32.totalorder %s28, 1
        %s288 = scalar_select %p287, %s28, 1
        %p289 = scmp.lt.s32.totalorder %s29, 0
        %s290 = scalar_select %p289, %s29, 0
        %s291 = sadd.s32 %s290, %s288
        %s292 = smul.addr %s291, 4
        %s293 = scalar_lea.vmem %s0, %s292
        %v295 = vld [vmem:[%s293] sm:$0xf]
        %v296 = vld [vmem:[%s1] sm:$0xf]
        %v297 = vld [vmem:[%s1 + $0x4] sm:$0xf]
        %v298 = vld [vmem:[%s1 + $0x8] sm:$0xf]
        %v299 = vld [vmem:[%s1 + $0xc] sm:$0xf]
        %v304 = vunpack.c.l.b16 %v296
        %v305 = vunpack.c.l.b16 %v297
        %v306 = vunpack.c.l.b16 %v298
        %v307 = vunpack.c.l.b16 %v299
        %v308 = vpack.c.b16 %v305, %v304
        %v309 = vpack.c.b16 %v307, %v306
        %vm312 = vcmask 261120
        %v314 = vsel %vm312, %v295, 0
        %316 = vmatpush.bf16.msra.mxu0 0
        %317 = vmatpush.bf16.msra.mxu0 0
        %318 = vmatpush.bf16.msra.mxu0 0
        %319 = vmatpush.bf16.msra.mxu0 0
        %320 = vmatpush.bf16.msra.mxu0 0
        %321 = vmatpush.bf16.msra.mxu0 0
        %322 = vmatpush.bf16.msra.mxu0 %v309
        %323 = vmatpush.bf16.msra.mxu0 %v308
        %324 = vmatmul.bf16.gmra.mxu0 %v314
        %v325 = vpop.f32.mrf.mxu0
        %v326 = vadd.f32 0.0, %v325
        %v327 = vpop.f32.mrf.mxu0
        %328 = vdwg.mxu0
        %v329 = vpack.c.bf16 %v326, %v326
        %vm330 = vcmask 125952
        %331 = vst.msk [vmem:[%s272] sm:$0xf] %vm330, %v329
        %v332 = vld [vmem:[%s2] sm:$0xf]
        %v333 = vld [vmem:[%s2 + $0x4] sm:$0xf]
        %v334 = vld [vmem:[%s2 + $0x8] sm:$0xf]
        %v335 = vld [vmem:[%s2 + $0xc] sm:$0xf]
        %v340 = vunpack.c.l.b16 %v332
        %v341 = vunpack.c.l.b16 %v333
        %v342 = vunpack.c.l.b16 %v334
        %v343 = vunpack.c.l.b16 %v335
        %v344 = vpack.c.b16 %v341, %v340
        %v345 = vpack.c.b16 %v343, %v342
        %348 = vmatpush.bf16.msra.mxu0 0
        %349 = vmatpush.bf16.msra.mxu0 0
        %350 = vmatpush.bf16.msra.mxu0 0
        %351 = vmatpush.bf16.msra.mxu0 0
        %352 = vmatpush.bf16.msra.mxu0 0
        %353 = vmatpush.bf16.msra.mxu0 0
        %354 = vmatpush.bf16.msra.mxu0 %v345
        %355 = vmatpush.bf16.msra.mxu0 %v344
        %356 = vmatmul.bf16.gmra.mxu0 %v314
        %v357 = vpop.f32.mrf.mxu0
        %v358 = vadd.f32 0.0, %v357
        %v359 = vpop.f32.mrf.mxu0
        %360 = vdwg.mxu0
        %v361 = vpack.c.bf16 %v358, %v358
        %362 = vst.msk [vmem:[%s279] sm:$0xf] %vm330, %v361
        %v363 = vld [vmem:[%s3] sm:$0xf]
        %v364 = vld [vmem:[%s3 + $0x4] sm:$0xf]
        %v365 = vld [vmem:[%s3 + $0x8] sm:$0xf]
        %v366 = vld [vmem:[%s3 + $0xc] sm:$0xf]
        %v371 = vunpack.c.l.b16 %v363
        %v372 = vunpack.c.l.b16 %v364
        %v373 = vunpack.c.l.b16 %v365
        %v374 = vunpack.c.l.b16 %v366
        %v375 = vpack.c.b16 %v372, %v371
        %v376 = vpack.c.b16 %v374, %v373
        %379 = vmatpush.bf16.msra.mxu0 0
        %380 = vmatpush.bf16.msra.mxu0 0
        %381 = vmatpush.bf16.msra.mxu0 0
        %382 = vmatpush.bf16.msra.mxu0 0
        %383 = vmatpush.bf16.msra.mxu0 0
        %384 = vmatpush.bf16.msra.mxu0 0
        %385 = vmatpush.bf16.msra.mxu0 %v376
        %386 = vmatpush.bf16.msra.mxu0 %v375
        %387 = vmatmul.bf16.gmra.mxu0 %v314
        %v388 = vpop.f32.mrf.mxu0
        %v389 = vadd.f32 0.0, %v388
        %v390 = vpop.f32.mrf.mxu0
        %391 = vdwg.mxu0
        %v392 = vpack.c.bf16 %v389, %v389
        %393 = vst.msk [vmem:[%s286] sm:$0xf] %vm330, %v392
        %s394 = sand.u32 %s137, 1
        %s395 = scalar_lea.sflag [#allocation3], %s394
        %s396 = sand.u32 %s137, 1
        %s397 = smul.addr %s396, 4
        %s398 = scalar_lea.vmem [#allocation2], %s397
        %s399 = sand.u32 %s24, 1
        %s400 = scalar_lea.sflag [#allocation5], %s399
        %s401 = sand.u32 %s165, 1
        %s402 = smul.addr %s401, 4
        %s403 = scalar_lea.vmem [#allocation4], %s402
        %s404 = sand.u32 %s24, 1
        %s405 = scalar_lea.sflag [#allocation5], %s404
        %s406 = sand.u32 %s193, 1
        %s407 = smul.addr %s406, 4
        %s408 = scalar_lea.vmem [#allocation6], %s407
        // Predicated region
        $region37: #{tpu_custom_call.1} parent=35 // pred_check
          %p409 = pneg %p147
        $region38: #{tpu_custom_call.1} parent=35 // pred_check_branch
          %411 = sbr.rel (%p409) target = $region40
        $region39: #{tpu_custom_call.1} parent=35 // pred_region
          %413 = vsyncadd %s395, 0
          %s414 = sadd.s32 %s29, %s28
          %s415 = smul.addr %s414, 4
          %s416 = scalar_lea.hbm %s4, %s415
          %s418 = sshll.u32 %s398, 4
          %s419 = int_to_ptr.vmem [resolvable:$true] %s418
          %s420 = sshll.u32 %s416, 4
          %s421 = int_to_ptr.hbm [resolvable:$true] %s420
          %423 = dma.vmem_to_hbm [thread:$0]  %s419, 64, %s421, %s395
        $region40: #{tpu_custom_call.1} parent=35 // pred_fallthru
          _
        // Predicated region
        $region41: #{tpu_custom_call.1} parent=35 // pred_check
          %p424 = pneg %p175
        $region42: #{tpu_custom_call.1} parent=35 // pred_check_branch
          %426 = sbr.rel (%p424) target = $region44
        $region43: #{tpu_custom_call.1} parent=35 // pred_region
          %428 = vsyncadd %s400, 0
          %s429 = sadd.s32 %s29, %s28
          %s430 = smul.addr %s429, 4
          %s431 = scalar_lea.hbm %s5, %s430
          %s433 = sshll.u32 %s403, 4
          %s434 = int_to_ptr.vmem [resolvable:$true] %s433
          %s435 = sshll.u32 %s431, 4
          %s436 = int_to_ptr.hbm [resolvable:$true] %s435
          %438 = dma.vmem_to_hbm [thread:$0]  %s434, 64, %s436, %s400
        $region44: #{tpu_custom_call.1} parent=35 // pred_fallthru
          _
        // Predicated region
        $region45: #{tpu_custom_call.1} parent=35 // pred_check
          %p439 = pneg %p203
        $region46: #{tpu_custom_call.1} parent=35 // pred_check_branch
          %441 = sbr.rel (%p439) target = $region48
        $region47: #{tpu_custom_call.1} parent=35 // pred_region
          %443 = vsyncadd %s405, 0
          %s444 = sadd.s32 %s29, %s28
          %s445 = smul.addr %s444, 4
          %s446 = scalar_lea.hbm %s6, %s445
          %s448 = sshll.u32 %s408, 4
          %s449 = int_to_ptr.vmem [resolvable:$true] %s448
          %s450 = sshll.u32 %s446, 4
          %s451 = int_to_ptr.hbm [resolvable:$true] %s450
          %453 = dma.vmem_to_hbm [thread:$0]  %s449, 64, %s451, %s405
        $region48: #{tpu_custom_call.1} parent=35 // pred_fallthru
          _
      $region36: #{tpu_custom_call.1} parent=5 // pred_fallthru
        _
      %p454 = scmp.le.s32.totalorder 2, %s19
      // Predicated region
      $region49: #{tpu_custom_call.1} parent=5 // pred_check
        %p455 = pneg %p454
      $region50: #{tpu_custom_call.1} parent=5 // pred_check_branch
        %457 = sbr.rel (%p455) target = $region52
      $region51: #{tpu_custom_call.1} parent=5 // pred_region
        %s458 = ssub.s32 %s19, 2
        // Predicated region
        $region53: #{tpu_custom_call.1} parent=51 // pred_check
          %p459 = pneg %p153
        $region54: #{tpu_custom_call.1} parent=51 // pred_check_branch
          %461 = sbr.rel (%p459) target = $region56
        $region55: #{tpu_custom_call.1} parent=51 // pred_region
          %s462 = sand.u32 %s138, 1
          %s463 = scalar_lea.sflag [#allocation3], %s462
          %s464 = sand.u32 %s138, 1
          %s465 = smul.addr %s464, 4
          %s466 = scalar_lea.vmem [#allocation2], %s465
          %468 = dma.done %s463, 64
        $region56: #{tpu_custom_call.1} parent=51 // pred_fallthru
          _
        // Predicated region
        $region57: #{tpu_custom_call.1} parent=51 // pred_check
          %p469 = pneg %p181
        $region58: #{tpu_custom_call.1} parent=51 // pred_check_branch
          %471 = sbr.rel (%p469) target = $region60
        $region59: #{tpu_custom_call.1} parent=51 // pred_region
          %s472 = sand.u32 %s25, 1
          %s473 = scalar_lea.sflag [#allocation5], %s472
          %s474 = sand.u32 %s166, 1
          %s475 = smul.addr %s474, 4
          %s476 = scalar_lea.vmem [#allocation4], %s475
          %478 = dma.done %s473, 64
        $region60: #{tpu_custom_call.1} parent=51 // pred_fallthru
          _
        // Predicated region
        $region61: #{tpu_custom_call.1} parent=51 // pred_check
          %p479 = pneg %p209
        $region62: #{tpu_custom_call.1} parent=51 // pred_check_branch
          %481 = sbr.rel (%p479) target = $region64
        $region63: #{tpu_custom_call.1} parent=51 // pred_region
          %s482 = sand.u32 %s25, 1
          %s483 = scalar_lea.sflag [#allocation5], %s482
          %s484 = sand.u32 %s194, 1
          %s485 = smul.addr %s484, 4
          %s486 = scalar_lea.vmem [#allocation6], %s485
          %488 = dma.done %s483, 64
        $region64: #{tpu_custom_call.1} parent=51 // pred_fallthru
          _
      $region52: #{tpu_custom_call.1} parent=5 // pred_fallthru
        _
    $region6: #{tpu_custom_call.1} parent=1 // loop_footer
      %s23 = sadd.s32 1, %s19
    $region7: #{tpu_custom_call.1} parent=1 // loop_footer_branch
      %18 = sbr.rel target = $region3
    $region8: #{tpu_custom_call.1} parent=1 // loop_exit
      _
    %489 = vsyncpa [#allocation3], 1
    %s490 = scalar_lea.sflag [#allocation3], 1
    %491 = vsyncpa %s490, 1
    %492 = vsyncpa [#allocation5], 1
    %s493 = scalar_lea.sflag [#allocation5], 1
    %494 = vsyncpa %s493, 1

</llo_original>
